<compile_context>
chip_gen: v6e
topology: v6e:2x2x1
jax: 0.10.0
libtpu: 0.0.40
codegen_flags: <defaults>
</compile_context>

<pallas_src>
import functools

import jax
import jax.numpy as jnp
from jax.experimental import pallas as pl
from jax.experimental.pallas import tpu as pltpu


def _round_up(x: int, m: int) -> int:
    return (x + m - 1) // m * m


def _linear_kernel_single_k(x_ref, w_ref, b_ref, o_ref):
    """One (tm, tn) output tile; the full K dim fits in one tile -> no scratch."""
    o_ref[...] = (
        jnp.dot(x_ref[...], w_ref[...], preferred_element_type=jnp.float32)
        + b_ref[...]
    ).astype(o_ref.dtype)


def _linear_kernel_tiled_k(x_ref, w_ref, b_ref, o_ref, acc_ref):
    """One (tm, tn) output tile; K is the innermost ("arbitrary") grid axis."""
    k = pl.program_id(2)

    @pl.when(k == 0)
    def _():
        acc_ref[...] = jnp.zeros_like(acc_ref)

    acc_ref[...] += jnp.dot(
        x_ref[...], w_ref[...], preferred_element_type=jnp.float32
    )

    @pl.when(k == pl.num_programs(2) - 1)
    def _():
        # Bias applied exactly once, in the finalize branch.
        o_ref[...] = (acc_ref[...] + b_ref[...]).astype(o_ref.dtype)


@functools.partial(jax.jit, static_argnames=("tm", "tn", "tk"))
def feedforward_forward(x, weight, bias, *, tm=256, tn=256, tk=512):
    """Pallas forward of nn.Linear(input_dim, output_dim).

    x:      (B, input_dim)           float32
    weight: (output_dim, input_dim)  (PyTorch convention)
    bias:   (output_dim,)
    returns (B, output_dim)
    """
    B, d_in = x.shape
    d_out, _ = weight.shape

    # Pre-transpose weight once (layout plumbing outside the kernel).
    w_t = weight.T  # (d_in, d_out)

    # Clamp tiles to the (aligned) problem size, then pad arrays to tile
    # multiples: sublane dim multiple of 8, lane dim multiple of 128.
    tm = min(tm, _round_up(B, 8))
    tn = min(tn, _round_up(d_out, 128))
    tk = min(tk, _round_up(d_in, 128))

    Bp = _round_up(B, tm)
    Np = _round_up(d_out, tn)
    Kp = _round_up(d_in, tk)

    # Pad only when needed (skipped entirely for already-aligned shapes).
    x_p = x if (Bp == B and Kp == d_in) else jnp.pad(
        x, ((0, Bp - B), (0, Kp - d_in)))
    w_p = w_t if (Kp == d_in and Np == d_out) else jnp.pad(
        w_t, ((0, Kp - d_in), (0, Np - d_out)))
    b_p = (bias if Np == d_out else jnp.pad(bias, (0, Np - d_out))).reshape(1, Np)

    single_k = (Kp // tk) == 1

    if single_k:
        grid = (Bp // tm, Np // tn)
        grid_spec = pltpu.PrefetchScalarGridSpec(
            num_scalar_prefetch=0,
            grid=grid,
            in_specs=[
                pl.BlockSpec((tm, tk), lambda i, j: (i, 0)),   # x tile
                pl.BlockSpec((tk, tn), lambda i, j: (0, j)),   # W^T tile
                pl.BlockSpec((1, tn), lambda i, j: (0, j)),    # bias tile
            ],
            out_specs=pl.BlockSpec((tm, tn), lambda i, j: (i, j)),
        )
        kernel = _linear_kernel_single_k
        dim_sem = ("parallel", "parallel")
    else:
        grid = (Bp // tm, Np // tn, Kp // tk)
        grid_spec = pltpu.PrefetchScalarGridSpec(
            num_scalar_prefetch=0,
            grid=grid,
            in_specs=[
                pl.BlockSpec((tm, tk), lambda i, j, k: (i, k)),  # x tile
                pl.BlockSpec((tk, tn), lambda i, j, k: (k, j)),  # W^T tile
                pl.BlockSpec((1, tn), lambda i, j, k: (0, j)),   # bias tile
            ],
            out_specs=pl.BlockSpec((tm, tn), lambda i, j, k: (i, j)),
            scratch_shapes=[pltpu.VMEM((tm, tn), jnp.float32)],
        )
        kernel = _linear_kernel_tiled_k
        dim_sem = ("parallel", "parallel", "arbitrary")

    out_padded = pl.pallas_call(
        kernel,
        out_shape=jax.ShapeDtypeStruct((Bp, Np), x.dtype),
        grid_spec=grid_spec,
        compiler_params=pltpu.CompilerParams(
            dimension_semantics=dim_sem,
            vmem_limit_bytes=64 * 1024 * 1024,
        ),
    )(x_p, w_p, b_p)

    if Bp == B and Np == d_out:
        return out_padded
    return out_padded[:B, :d_out]


if __name__ == "__main__":
    # Small shapes consistent with FeedforwardNeuralNetModel(input_dim, output_dim).
    batch = 8
    input_dim = 16
    output_dim = 32

    key = jax.random.PRNGKey(0)
    kx, kw, kb = jax.random.split(key, 3)

    x = jax.random.normal(kx, (batch, input_dim), dtype=jnp.float32)
    # Deterministic parameter init (mimics nn.Linear uniform(-1/sqrt(in), 1/sqrt(in))).
    bound = 1.0 / jnp.sqrt(jnp.float32(input_dim))
    weight = jax.random.uniform(
        kw, (output_dim, input_dim), dtype=jnp.float32, minval=-bound, maxval=bound
    )
    bias = jax.random.uniform(
        kb, (output_dim,), dtype=jnp.float32, minval=-bound, maxval=bound
    )

    out = feedforward_forward(x, weight, bias)
    out = jax.block_until_ready(out)

    # Correctness check against plain JAX reference (PyTorch Linear semantics).
    ref = x @ weight.T + bias
    assert out.shape == (batch, output_dim)
    assert jnp.allclose(out, ref, atol=1e-5, rtol=1e-5)

    print("KERNEL_OK")
</pallas_src>

<mosaic_0001>
module attributes {stable_mosaic.version = 11 : i64} {
  func.func @_linear_kernel_single_k(%arg0: i32, %arg1: i32, %arg2: memref<8x128xf32, #tpu.memory_space<vmem>>, %arg3: memref<128x128xf32, #tpu.memory_space<vmem>>, %arg4: memref<1x128xf32, #tpu.memory_space<vmem>>, %arg5: memref<8x128xf32, #tpu.memory_space<vmem>>) attributes {dimension_semantics = [#tpu.dimension_semantics<parallel>, #tpu.dimension_semantics<parallel>], iteration_bounds = array<i64: 1, 1>, scalar_prefetch = 0 : i64, scratch_operands = 0 : i64, tpu.core_type = #tpu.core_type<tc>, window_params = [{transform_indices = @transform_0, window_bounds = array<i64: 8, 128>}, {transform_indices = @transform_1, window_bounds = array<i64: 128, 128>}, {transform_indices = @transform_2, window_bounds = array<i64: 1, 128>}, {transform_indices = @transform_3, window_bounds = array<i64: 8, 128>}]} {
    %c0 = arith.constant 0 : index
    %c0_0 = arith.constant 0 : index
    %0 = vector.load %arg2[%c0, %c0_0] : memref<8x128xf32, #tpu.memory_space<vmem>>, vector<8x128xf32>
    %c0_1 = arith.constant 0 : index
    %c0_2 = arith.constant 0 : index
    %1 = vector.load %arg3[%c0_1, %c0_2] : memref<128x128xf32, #tpu.memory_space<vmem>>, vector<128x128xf32>
    %cst = arith.constant dense<0.000000e+00> : vector<8x128xf32>
    %2 = tpu.matmul %0, %1, %cst {dimension_numbers = #tpu.dot_dimension_numbers<[1], [0], [0], [1], [0, 0, 1, 1], [], []>} : vector<8x128xf32>, vector<128x128xf32>, vector<8x128xf32> -> vector<8x128xf32>
    %c0_3 = arith.constant 0 : index
    %c0_4 = arith.constant 0 : index
    %3 = vector.load %arg4[%c0_3, %c0_4] : memref<1x128xf32, #tpu.memory_space<vmem>>, vector<1x128xf32>
    %4 = vector.broadcast %3 : vector<1x128xf32> to vector<8x128xf32>
    %5 = arith.addf %2, %4 : vector<8x128xf32>
    %c0_5 = arith.constant 0 : index
    %c0_6 = arith.constant 0 : index
    %6 = vector.load %arg5[%c0_5, %c0_6] : memref<8x128xf32, #tpu.memory_space<vmem>>, vector<8x128xf32>
    tpu.vector_store %arg5[%c0_5, %c0_6], %5 {strides = array<i32>} : memref<8x128xf32, #tpu.memory_space<vmem>>, vector<8x128xf32>,
    return
  }
  func.func @transform_0(%arg0: i32, %arg1: i32) -> (i32, i32) {
    %c0_i32 = arith.constant 0 : i32
    %c0_i32_0 = arith.constant 0 : i32
    return %arg0, %c0_i32 : i32, i32
  }
  func.func @transform_1(%arg0: i32, %arg1: i32) -> (i32, i32) {
    %c0_i32 = arith.constant 0 : i32
    %c0_i32_0 = arith.constant 0 : i32
    return %c0_i32, %arg1 : i32, i32
  }
  func.func @transform_2(%arg0: i32, %arg1: i32) -> (i32, i32) {
    %c0_i32 = arith.constant 0 : i32
    %c0_i32_0 = arith.constant 0 : i32
    return %c0_i32, %arg1 : i32, i32
  }
  func.func @transform_3(%arg0: i32, %arg1: i32) -> (i32, i32) {
    %c0_i32 = arith.constant 0 : i32
    return %arg0, %arg1 : i32, i32
  }
}

</mosaic_0001>

<llo_original>
// kernel: feedforward_forward.1
$region0: #{feedforward_forward.1}
  #allocation0 [shape = 'u32[]', space=smem, size = 0x4, offset = 0x4, fixed_abs, tag = 'smem constant byte address 0x4 - core index']
  #allocation1 [shape = 'u32[144,128]{1,0:T(1,128)}', space=vmem, size = 0x12000, scoped, tag = 'internal scratch']
  %s0 = inlined_call_operand.vmem [shape: f32[8,128], index: 0, kind: input, shape index: {}]
  %s1 = inlined_call_operand.vmem [shape: f32[128,128], index: 1, kind: input, shape index: {}]
  %s2 = inlined_call_operand.vmem [shape: f32[1,128], index: 2, kind: input, shape index: {}]
  %s3 = inlined_call_operand.hbm [shape: f32[8,128], index: 3, kind: output, shape index: {}]
  %s4 = sld [smem:[#allocation0]]
  $region22: #{feedforward_forward.1} parent=0
    _
  %s6 = ssub.s32 1, %s4
  %s7 = scalar_select 0, %s6, %s4
  $region1: #{feedforward_forward.1} parent=0
    #allocation2 [shape = 'u8[4096]{0}', space=vmem, size = 0x1000, scoped, tag = 'output window, operand 0, single buffered']
    #allocation3 [shape = 's32[1]{0}', space=sflag, size = 0x4, scoped, tag = 'scoped memory for feedforward_forward.1']
    %8 = vsyncpa [#allocation3], 0
    // Predicated region
    $region2: #{feedforward_forward.1} parent=1 // pred_check
      _
    $region3: #{feedforward_forward.1} parent=1 // pred_check_branch
      %10 = sbr.rel (0) target = $region5
    $region4: #{feedforward_forward.1} parent=1 // pred_region
      _
    $region5: #{feedforward_forward.1} parent=1 // pred_fallthru
      _
    // Predicated region
    $region6: #{feedforward_forward.1} parent=1 // pred_check
      _
    $region7: #{feedforward_forward.1} parent=1 // pred_check_branch
      %12 = sbr.rel (0) target = $region9
    $region8: #{feedforward_forward.1} parent=1 // pred_region
      _
    $region9: #{feedforward_forward.1} parent=1 // pred_fallthru
      _
    // Predicated region
    $region10: #{feedforward_forward.1} parent=1 // pred_check
      _
    $region11: #{feedforward_forward.1} parent=1 // pred_check_branch
      %14 = sbr.rel (0) target = $region13
    $region12: #{feedforward_forward.1} parent=1 // pred_region
      _
    $region13: #{feedforward_forward.1} parent=1 // pred_fallthru
      _
    %v15 = vld [vmem:[%s0] sm:$0xff]
    %v16 = vld [vmem:[%s1] sm:$0xff]
    %v17 = vld [vmem:[%s1 + $0x8] sm:$0xff]
    %v18 = vld [vmem:[%s1 + $0x10] sm:$0xff]
    %v19 = vld [vmem:[%s1 + $0x18] sm:$0xff]
    %v20 = vld [vmem:[%s1 + $0x20] sm:$0xff]
    %v21 = vld [vmem:[%s1 + $0x28] sm:$0xff]
    %v22 = vld [vmem:[%s1 + $0x30] sm:$0xff]
    %v23 = vld [vmem:[%s1 + $0x38] sm:$0xff]
    %v24 = vld [vmem:[%s1 + $0x40] sm:$0xff]
    %v25 = vld [vmem:[%s1 + $0x48] sm:$0xff]
    %v26 = vld [vmem:[%s1 + $0x50] sm:$0xff]
    %v27 = vld [vmem:[%s1 + $0x58] sm:$0xff]
    %v28 = vld [vmem:[%s1 + $0x60] sm:$0xff]
    %v29 = vld [vmem:[%s1 + $0x68] sm:$0xff]
    %v30 = vld [vmem:[%s1 + $0x70] sm:$0xff]
    %v31 = vld [vmem:[%s1 + $0x78] sm:$0xff]
    %v32 = vld [vmem:[%s2] sm:$0x1]
    %v34 = vlaneseq
    %v35 = vshrl.u32 %v34, 7
    %v36 = vsub.s32 0, %v35
    %v37 = vrot.slane %v32, %v36
    %39 = vmatprep.subr.mxu0 0.0
    %40 = vmatpush1.msra.mxu0 %v31
    %41 = vmatprep.subr.mxu0 0.0
    %42 = vmatpush1.msra.mxu0 %v30
    %43 = vmatprep.subr.mxu0 0.0
    %44 = vmatpush1.msra.mxu0 %v29
    %45 = vmatprep.subr.mxu0 0.0
    %46 = vmatpush1.msra.mxu0 %v28
    %47 = vmatprep.subr.mxu0 0.0
    %48 = vmatpush1.msra.mxu0 %v27
    %49 = vmatprep.subr.mxu0 0.0
    %50 = vmatpush1.msra.mxu0 %v26
    %51 = vmatprep.subr.mxu0 0.0
    %52 = vmatpush1.msra.mxu0 %v25
    %53 = vmatprep.subr.mxu0 0.0
    %54 = vmatpush1.msra.mxu0 %v24
    %55 = vmatprep.subr.mxu0 0.0
    %56 = vmatpush1.msra.mxu0 %v23
    %57 = vmatprep.subr.mxu0 0.0
    %58 = vmatpush1.msra.mxu0 %v22
    %59 = vmatprep.subr.mxu0 0.0
    %60 = vmatpush1.msra.mxu0 %v21
    %61 = vmatprep.subr.mxu0 0.0
    %62 = vmatpush1.msra.mxu0 %v20
    %63 = vmatprep.subr.mxu0 0.0
    %64 = vmatpush1.msra.mxu0 %v19
    %65 = vmatprep.subr.mxu0 0.0
    %66 = vmatpush1.msra.mxu0 %v18
    %67 = vmatprep.subr.mxu0 0.0
    %68 = vmatpush1.msra.mxu0 %v17
    %69 = vmatprep.subr.mxu0 0.0
    %70 = vmatpush1.msra.mxu0 %v16
    %71 = vmatprep.subr.mxu0 0.0
    %72 = vmatpush2.msra.mxu0 0.0
    %73 = vmatprep.subr.mxu0 0.0
    %74 = vmatpush2.msra.mxu0 0.0
    %75 = vmatprep.subr.mxu0 0.0
    %76 = vmatpush2.msra.mxu0 0.0
    %77 = vmatprep.subr.mxu0 0.0
    %78 = vmatpush2.msra.mxu0 0.0
    %79 = vmatprep.subr.mxu0 0.0
    %80 = vmatpush2.msra.mxu0 0.0
    %81 = vmatprep.subr.mxu0 0.0
    %82 = vmatpush2.msra.mxu0 0.0
    %83 = vmatprep.subr.mxu0 0.0
    %84 = vmatpush2.msra.mxu0 0.0
    %85 = vmatprep.subr.mxu0 0.0
    %86 = vmatpush2.msra.mxu0 0.0
    %87 = vmatprep.subr.mxu0 0.0
    %88 = vmatpush2.msra.mxu0 0.0
    %89 = vmatprep.subr.mxu0 0.0
    %90 = vmatpush2.msra.mxu0 0.0
    %91 = vmatprep.subr.mxu0 0.0
    %92 = vmatpush2.msra.mxu0 0.0
    %93 = vmatprep.subr.mxu0 0.0
    %94 = vmatpush2.msra.mxu0 0.0
    %95 = vmatprep.subr.mxu0 0.0
    %96 = vmatpush2.msra.mxu0 0.0
    %97 = vmatprep.subr.mxu0 0.0
    %98 = vmatpush2.msra.mxu0 0.0
    %99 = vmatprep.subr.mxu0 0.0
    %100 = vmatpush2.msra.mxu0 0.0
    %101 = vmatprep.subr.mxu0 0.0
    %102 = vmatpush2.msra.mxu0 0.0
    %103 = vmatprep.mubr.f32.mxu0 0.0
    %104 = vmatmul.mubr.f32.gmra.mxu0 %v15
    %v105 = vpop.f32.mrf.mxu0
    %v106 = vadd.f32 %v37, %v105
    %v107 = vpop.f32.mrf.mxu0
    %108 = vdwg.mxu0
    %109 = vst [vmem:[#allocation2] sm:$0xff] %v106
    // Predicated region
    $region14: #{feedforward_forward.1} parent=1 // pred_check
      _
    $region15: #{feedforward_forward.1} parent=1 // pred_check_branch
      %111 = sbr.rel (0) target = $region17
    $region16: #{feedforward_forward.1} parent=1 // pred_region
      %s113 = ssub.s32 128, 128
      %114 = vsyncadd [#allocation3], %s113
      %s116 = sshll.u32 [#allocation2], 4
      %s117 = int_to_ptr.vmem [resolvable:$true] %s116
      %119 = dma.vmem_to_hbm [thread:$0]  %s117, 128, %s3, [#allocation3]
    $region17: #{feedforward_forward.1} parent=1 // pred_fallthru
      _
    // Predicated region
    $region18: #{feedforward_forward.1} parent=1 // pred_check
      _
    $region19: #{feedforward_forward.1} parent=1 // pred_check_branch
      %121 = sbr.rel (0) target = $region21
    $region20: #{feedforward_forward.1} parent=1 // pred_region
      %122 = dma.done [#allocation3], 128
    $region21: #{feedforward_forward.1} parent=1 // pred_fallthru
      _
    %123 = vsyncpa [#allocation3], 1

</llo_original>
